<compile_context>
chip_gen: v5e
topology: v5e:2x2
jax: 0.10.0
libtpu: 0.0.40
codegen_flags: <defaults>
</compile_context>

<pallas_src>
import numpy as np
import jax
import jax.numpy as jnp
from jax.experimental import pallas as pl
from jax.experimental.pallas import tpu as pltpu


def _round_up(x, m):
    return ((x + m - 1) // m) * m


def _erf(x):
    # Abramowitz & Stegun 7.1.26 polynomial erf, |error| <= 1.5e-7.
    # Uses only abs/mul/add/div/exp so it lowers cleanly through Mosaic and
    # matches PyTorch's exact (erf-based) GELU to float32 noise.
    a1, a2, a3, a4, a5 = 0.254829592, -0.284496736, 1.421413741, -1.453152027, 1.061405429
    p = 0.3275911
    ax = jnp.abs(x)
    t = 1.0 / (1.0 + p * ax)
    poly = ((((a5 * t + a4) * t + a3) * t + a2) * t + a1) * t
    y = 1.0 - poly * jnp.exp(-ax * ax)
    return jnp.where(x < 0.0, -y, y)


def _gelu_exact(x):
    return 0.5 * x * (1.0 + _erf(x * 0.7071067811865476))


def _intermediate_kernel(x_ref, w_ref, b_ref, o_ref):
    # x_ref: (tm, K)  w_ref: (K, tn)  b_ref: (1, tn)  o_ref: (tm, tn)
    z = jnp.dot(x_ref[...], w_ref[...], preferred_element_type=jnp.float32)
    z = z + b_ref[...]                                   # fused bias add
    o_ref[...] = _gelu_exact(z).astype(o_ref.dtype)      # fused exact GELU


def data2vec_vision_intermediate(hidden_states, dense_weight, dense_bias,
                                 *, tm=512, tn=1024):
    """hidden_states: (B, S, H).  dense_weight: (I, H) (PyTorch nn.Linear
    layout).  dense_bias: (I,).  Returns (B, S, I) = GELU(x @ W^T + b)."""
    B, S, H = hidden_states.shape
    I = dense_weight.shape[0]
    M, K, N = B * S, H, I

    x = hidden_states.reshape(M, K)     # metadata-only reshape, no copy
    # One-time (K, N) layout for the (small) weight; a real deployment would
    # store the weight pre-transposed at model init.
    w = jnp.transpose(dense_weight)
    b = dense_bias.reshape(1, N)

    # Tile sizes: cap, round small dims up to hardware-friendly multiples.
    # tk == K always (no contraction tiling, no K padding).
    tm = min(tm, _round_up(M, 8))
    tn = min(tn, _round_up(N, 128))

    # Grid ordered (N-tiles, M-tiles): weight block index is constant across
    # the inner M loop -> weight DMA'd from HBM ~once; x re-read ceil(N/tn)x.
    grid = (pl.cdiv(N, tn), pl.cdiv(M, tm))

    itemsize = np.dtype(hidden_states.dtype).itemsize
    cost = pl.CostEstimate(
        flops=2 * M * K * N,
        transcendentals=M * N,
        bytes_accessed=(M * K + K * N + N + M * N) * itemsize,
    )

    out = pl.pallas_call(
        _intermediate_kernel,
        out_shape=jax.ShapeDtypeStruct((M, N), hidden_states.dtype),
        grid_spec=pltpu.PrefetchScalarGridSpec(
            num_scalar_prefetch=0,
            grid=grid,
            in_specs=[
                pl.BlockSpec((tm, K), lambda j, i: (i, 0)),   # activations
                pl.BlockSpec((K, tn), lambda j, i: (0, j)),   # weight (resident over i)
                pl.BlockSpec((1, tn), lambda j, i: (0, j)),   # bias
            ],
            out_specs=pl.BlockSpec((tm, tn), lambda j, i: (i, j)),
        ),
        compiler_params=pltpu.CompilerParams(
            dimension_semantics=("parallel", "parallel")),
        cost_estimate=cost,
    )(x, w, b)

    return out.reshape(B, S, N)


# -----------------------------------------------------------------------------
# Pure-JAX reference (mirrors the PyTorch forward: Linear + exact GELU)
# -----------------------------------------------------------------------------
def _reference(hidden_states, dense_weight, dense_bias):
    z = jnp.einsum("bsh,ih->bsi", hidden_states, dense_weight) + dense_bias
    return jax.nn.gelu(z, approximate=False)   # HF ACT2FN["gelu"] = exact erf GELU


if __name__ == "__main__":
    key = jax.random.PRNGKey(0)
    B, S, H, I = 2, 8, 32, 128                  # hidden=32, intermediate=128

    k1, k2, k3 = jax.random.split(key, 3)
    x = jax.random.normal(k1, (B, S, H), dtype=jnp.float32)
    dense_w = jax.random.normal(k2, (I, H), dtype=jnp.float32) * (1.0 / np.sqrt(H))
    dense_b = 0.1 * jax.random.normal(k3, (I,), dtype=jnp.float32)

    out = data2vec_vision_intermediate(x, dense_w, dense_b)
    out = jax.block_until_ready(out)

    ref = _reference(x, dense_w, dense_b)
    assert out.shape == (B, S, I), out.shape
    np.testing.assert_allclose(np.asarray(out), np.asarray(ref), rtol=1e-4, atol=1e-5)

    print("KERNEL_OK")
</pallas_src>

<mosaic_0001>
module attributes {stable_mosaic.version = 11 : i64} {
  func.func @_intermediate_kernel(%arg0: i32, %arg1: i32, %arg2: memref<16x32xf32, #tpu.memory_space<vmem>>, %arg3: memref<32x128xf32, #tpu.memory_space<vmem>>, %arg4: memref<1x128xf32, #tpu.memory_space<vmem>>, %arg5: memref<16x128xf32, #tpu.memory_space<vmem>>) attributes {dimension_semantics = [#tpu.dimension_semantics<parallel>, #tpu.dimension_semantics<parallel>], iteration_bounds = array<i64: 1, 1>, scalar_prefetch = 0 : i64, scratch_operands = 0 : i64, tpu.core_type = #tpu.core_type<tc>, window_params = [{transform_indices = @transform_0, window_bounds = array<i64: 16, 32>}, {transform_indices = @transform_1, window_bounds = array<i64: 32, 128>}, {transform_indices = @transform_2, window_bounds = array<i64: 1, 128>}, {transform_indices = @transform_3, window_bounds = array<i64: 16, 128>}]} {
    %c0 = arith.constant 0 : index
    %c0_0 = arith.constant 0 : index
    %0 = vector.load %arg2[%c0, %c0_0] : memref<16x32xf32, #tpu.memory_space<vmem>>, vector<16x32xf32>
    %c0_1 = arith.constant 0 : index
    %c0_2 = arith.constant 0 : index
    %1 = vector.load %arg3[%c0_1, %c0_2] : memref<32x128xf32, #tpu.memory_space<vmem>>, vector<32x128xf32>
    %cst = arith.constant dense<0.000000e+00> : vector<16x128xf32>
    %2 = tpu.matmul %0, %1, %cst {dimension_numbers = #tpu.dot_dimension_numbers<[1], [0], [0], [1], [0, 0, 1, 1], [], []>} : vector<16x32xf32>, vector<32x128xf32>, vector<16x128xf32> -> vector<16x128xf32>
    %c0_3 = arith.constant 0 : index
    %c0_4 = arith.constant 0 : index
    %3 = vector.load %arg4[%c0_3, %c0_4] : memref<1x128xf32, #tpu.memory_space<vmem>>, vector<1x128xf32>
    %4 = vector.broadcast %3 : vector<1x128xf32> to vector<16x128xf32>
    %5 = arith.addf %2, %4 : vector<16x128xf32>
    %cst_5 = arith.constant 5.000000e-01 : f32
    %6 = vector.broadcast %cst_5 : f32 to vector<16x128xf32>
    %7 = arith.mulf %6, %5 : vector<16x128xf32>
    %cst_6 = arith.constant 0.707106769 : f32
    %8 = vector.broadcast %cst_6 : f32 to vector<16x128xf32>
    %9 = arith.mulf %5, %8 : vector<16x128xf32>
    %10 = math.absf %9 : vector<16x128xf32>
    %cst_7 = arith.constant 0.327591091 : f32
    %11 = vector.broadcast %cst_7 : f32 to vector<16x128xf32>
    %12 = arith.mulf %11, %10 : vector<16x128xf32>
    %cst_8 = arith.constant 1.000000e+00 : f32
    %13 = vector.broadcast %cst_8 : f32 to vector<16x128xf32>
    %14 = arith.addf %13, %12 : vector<16x128xf32>
    %cst_9 = arith.constant 1.000000e+00 : f32
    %15 = vector.broadcast %cst_9 : f32 to vector<16x128xf32>
    %16 = arith.divf %15, %14 : vector<16x128xf32>
    %cst_10 = arith.constant 1.06140542 : f32
    %17 = vector.broadcast %cst_10 : f32 to vector<16x128xf32>
    %18 = arith.mulf %17, %16 : vector<16x128xf32>
    %cst_11 = arith.constant -1.45315206 : f32
    %19 = vector.broadcast %cst_11 : f32 to vector<16x128xf32>
    %20 = arith.addf %18, %19 : vector<16x128xf32>
    %21 = arith.mulf %20, %16 : vector<16x128xf32>
    %cst_12 = arith.constant 1.42141378 : f32
    %22 = vector.broadcast %cst_12 : f32 to vector<16x128xf32>
    %23 = arith.addf %21, %22 : vector<16x128xf32>
    %24 = arith.mulf %23, %16 : vector<16x128xf32>
    %cst_13 = arith.constant -0.284496725 : f32
    %25 = vector.broadcast %cst_13 : f32 to vector<16x128xf32>
    %26 = arith.addf %24, %25 : vector<16x128xf32>
    %27 = arith.mulf %26, %16 : vector<16x128xf32>
    %cst_14 = arith.constant 0.254829586 : f32
    %28 = vector.broadcast %cst_14 : f32 to vector<16x128xf32>
    %29 = arith.addf %27, %28 : vector<16x128xf32>
    %30 = arith.mulf %29, %16 : vector<16x128xf32>
    %cst_15 = arith.constant 0.000000e+00 : f32
    %31 = vector.broadcast %cst_15 : f32 to vector<16x128xf32>
    %32 = arith.subf %31, %10 : vector<16x128xf32>
    %33 = arith.mulf %32, %10 : vector<16x128xf32>
    %34 = math.exp %33 : vector<16x128xf32>
    %35 = arith.mulf %30, %34 : vector<16x128xf32>
    %cst_16 = arith.constant 1.000000e+00 : f32
    %36 = vector.broadcast %cst_16 : f32 to vector<16x128xf32>
    %37 = arith.subf %36, %35 : vector<16x128xf32>
    %cst_17 = arith.constant 0.000000e+00 : f32
    %38 = vector.broadcast %cst_17 : f32 to vector<16x128xf32>
    %39 = arith.cmpf olt, %9, %38 : vector<16x128xf32>
    %cst_18 = arith.constant 0.000000e+00 : f32
    %40 = vector.broadcast %cst_18 : f32 to vector<16x128xf32>
    %41 = arith.subf %40, %37 : vector<16x128xf32>
    %42 = arith.select %39, %41, %37 : vector<16x128xi1>, vector<16x128xf32>
    %cst_19 = arith.constant 1.000000e+00 : f32
    %43 = vector.broadcast %cst_19 : f32 to vector<16x128xf32>
    %44 = arith.addf %43, %42 : vector<16x128xf32>
    %45 = arith.mulf %7, %44 : vector<16x128xf32>
    %c0_20 = arith.constant 0 : index
    %c0_21 = arith.constant 0 : index
    %46 = vector.load %arg5[%c0_20, %c0_21] : memref<16x128xf32, #tpu.memory_space<vmem>>, vector<16x128xf32>
    tpu.vector_store %arg5[%c0_20, %c0_21], %45 {strides = array<i32>} : memref<16x128xf32, #tpu.memory_space<vmem>>, vector<16x128xf32>,
    return
  }
  func.func @transform_0(%arg0: i32, %arg1: i32) -> (i32, i32) {
    %c0_i32 = arith.constant 0 : i32
    %c0_i32_0 = arith.constant 0 : i32
    return %arg1, %c0_i32 : i32, i32
  }
  func.func @transform_1(%arg0: i32, %arg1: i32) -> (i32, i32) {
    %c0_i32 = arith.constant 0 : i32
    %c0_i32_0 = arith.constant 0 : i32
    return %c0_i32, %arg0 : i32, i32
  }
  func.func @transform_2(%arg0: i32, %arg1: i32) -> (i32, i32) {
    %c0_i32 = arith.constant 0 : i32
    %c0_i32_0 = arith.constant 0 : i32
    return %c0_i32, %arg0 : i32, i32
  }
  func.func @transform_3(%arg0: i32, %arg1: i32) -> (i32, i32) {
    %c0_i32 = arith.constant 0 : i32
    return %arg1, %arg0 : i32, i32
  }
}

</mosaic_0001>

<llo_original>
// kernel: tpu_custom_call.1
$region0: #{tpu_custom_call.1}
  #allocation0 [shape = 'u32[]', space=smem, size = 0x4, offset = 0x4, fixed_abs, tag = 'smem constant byte address 0x4 - core index']
  #allocation1 [shape = 'u32[72,128]{1,0:T(1,128)}', space=vmem, size = 0x9000, scoped, tag = 'internal scratch']
  %s0 = inlined_call_operand.hbm [shape: f32[16,32], index: 0, kind: input, shape index: {}]
  %s1 = inlined_call_operand.hbm [shape: f32[32,128], index: 1, kind: input, shape index: {}]
  %s2 = inlined_call_operand.vmem [shape: f32[1,128], index: 2, kind: input, shape index: {}]
  %s3 = inlined_call_operand.hbm [shape: f32[16,128], index: 3, kind: output, shape index: {}]
  %s4 = sld [smem:[#allocation0]]
  $region30: #{tpu_custom_call.1} parent=0
    _
  %s6 = ssub.s32 1, %s4
  %s7 = scalar_select 0, %s6, %s4
  $region1: #{tpu_custom_call.1} parent=0
    #allocation2 [shape = 'u8[8192]{0}', space=vmem, size = 0x2000, scoped, tag = 'input window, operand 0, single buffered']
    #allocation3 [shape = 's32[1]{0}', space=sflag, size = 0x4, scoped, tag = 'scoped memory for tpu_custom_call.1']
    #allocation4 [shape = 's32[1]{0}', space=sflag, size = 0x4, scoped, tag = 'scoped memory for tpu_custom_call.1']
    #allocation5 [shape = 'u8[16384]{0}', space=vmem, size = 0x4000, scoped, tag = 'input window, operand 1, single buffered']
    #allocation6 [shape = 's32[1]{0}', space=sflag, size = 0x4, scoped, tag = 'scoped memory for tpu_custom_call.1']
    #allocation7 [shape = 'u8[8192]{0}', space=vmem, size = 0x2000, scoped, tag = 'output window, operand 0, single buffered']
    %8 = vsyncpa [#allocation3], 0
    %9 = vsyncpa [#allocation6], 0
    %10 = vsyncpa [#allocation4], 0
    // Predicated region
    $region2: #{tpu_custom_call.1} parent=1 // pred_check
      _
    $region3: #{tpu_custom_call.1} parent=1 // pred_check_branch
      %12 = sbr.rel (0) target = $region5
    $region4: #{tpu_custom_call.1} parent=1 // pred_region
      %14 = vsyncadd [#allocation3], 0
      %s15 = sshll.u32 %s0, 4
      %s16 = int_to_ptr.hbm [resolvable:$true] %s15
      %s17 = sshll.u32 [#allocation2], 4
      %s18 = int_to_ptr.vmem [resolvable:$true] %s17
      %23 = dma.hbm_to_vmem [thread:$0]  %s16, 256, %s18, [#allocation3], 128, 128, 8
    $region5: #{tpu_custom_call.1} parent=1 // pred_fallthru
      _
    // Predicated region
    $region6: #{tpu_custom_call.1} parent=1 // pred_check
      _
    $region7: #{tpu_custom_call.1} parent=1 // pred_check_branch
      %25 = sbr.rel (0) target = $region9
    $region8: #{tpu_custom_call.1} parent=1 // pred_region
      %27 = vsyncadd [#allocation6], 0
      %s28 = sshll.u32 %s1, 4
      %s29 = int_to_ptr.hbm [resolvable:$true] %s28
      %s30 = sshll.u32 [#allocation5], 4
      %s31 = int_to_ptr.vmem [resolvable:$true] %s30
      %36 = dma.hbm_to_vmem [thread:$0]  %s29, 512, %s31, [#allocation6], 128, 128, 8
    $region9: #{tpu_custom_call.1} parent=1 // pred_fallthru
      _
    // Predicated region
    $region10: #{tpu_custom_call.1} parent=1 // pred_check
      _
    $region11: #{tpu_custom_call.1} parent=1 // pred_check_branch
      %38 = sbr.rel (0) target = $region13
    $region12: #{tpu_custom_call.1} parent=1 // pred_region
      _
    $region13: #{tpu_custom_call.1} parent=1 // pred_fallthru
      _
    // Predicated region
    $region14: #{tpu_custom_call.1} parent=1 // pred_check
      _
    $region15: #{tpu_custom_call.1} parent=1 // pred_check_branch
      %40 = sbr.rel (0) target = $region17
    $region16: #{tpu_custom_call.1} parent=1 // pred_region
      %42 = dma.done [#allocation3], 256
    $region17: #{tpu_custom_call.1} parent=1 // pred_fallthru
      _
    // Predicated region
    $region18: #{tpu_custom_call.1} parent=1 // pred_check
      _
    $region19: #{tpu_custom_call.1} parent=1 // pred_check_branch
      %44 = sbr.rel (0) target = $region21
    $region20: #{tpu_custom_call.1} parent=1 // pred_region
      %46 = dma.done [#allocation6], 512
    $region21: #{tpu_custom_call.1} parent=1 // pred_fallthru
      _
    %v47 = vld [vmem:[#allocation2] sm:$0xff]
    %v48 = vld [vmem:[#allocation2 + $0x8] sm:$0xff]
    %v49 = vld [vmem:[#allocation5] sm:$0xff]
    %v50 = vld [vmem:[#allocation5 + $0x8] sm:$0xff]
    %v51 = vld [vmem:[#allocation5 + $0x10] sm:$0xff]
    %v52 = vld [vmem:[#allocation5 + $0x18] sm:$0xff]
    %v53 = vld [vmem:[%s2] sm:$0x1]
    %v55 = vperm.slane %v53, 0
    %vm57 = vcmask 261120
    %v59 = vsel %vm57, %v47, 0
    %v62 = vsel %vm57, %v48, 0
    %64 = vmatpush.msra.mxu0 0.0
    %65 = vmatpush.msra.mxu0 0.0
    %66 = vmatpush.msra.mxu0 0.0
    %67 = vmatpush.msra.mxu0 0.0
    %68 = vmatpush.msra.mxu0 0.0
    %69 = vmatpush.msra.mxu0 0.0
    %70 = vmatpush.msra.mxu0 0.0
    %71 = vmatpush.msra.mxu0 0.0
    %72 = vmatpush.msra.mxu0 0.0
    %73 = vmatpush.msra.mxu0 0.0
    %74 = vmatpush.msra.mxu0 0.0
    %75 = vmatpush.msra.mxu0 0.0
    %76 = vmatpush.msra.mxu0 %v52
    %77 = vmatpush.msra.mxu0 %v51
    %78 = vmatpush.msra.mxu0 %v50
    %79 = vmatpush.msra.mxu0 %v49
    %80 = vmatmul.f32.gmra.mxu0 %v59
    %v81 = vpop.f32.mrf.mxu0
    %v82 = vadd.f32 %v55, %v81
    %83 = vmatmul.f32.gmra.mxu0 %v62
    %v84 = vpop.f32.mrf.mxu0
    %v85 = vadd.f32 %v55, %v84
    %86 = vdwg.mxu0
    %v87 = vmul.f32 %v82, 0.5
    %v88 = vmul.f32 %v85, 0.5
    %v89 = vmul.f32 %v82, 0.70710677
    %v90 = vmul.f32 %v85, 0.70710677
    %v91 = vand.u32 2147483647, %v89
    %v92 = vand.u32 2147483647, %v90
    %v93 = vmul.f32 %v91, 0.3275911
    %v94 = vmul.f32 %v92, 0.3275911
    %v95 = vadd.f32 %v93, 1.0
    %v96 = vadd.f32 %v94, 1.0
    %v97 = vrcp.pop %v95
    %v98 = vmul.f32 %v95, %v97
    %v99 = vsub.f32 1.0, %v98
    %v100 = vmul.f32 %v97, %v99
    %v101 = vadd.f32 %v97, %v100
    %vm102 = vweird.f32 %v95
    %vm103 = vweird.f32 %v97
    %vm104 = vmor %vm102, %vm103
    %v105 = vsel %vm104, %v97, %v101
    %v106 = vand.u32 2147483647, %v95
    %vm107 = vcmp.eq.f32.partialorder %v106, 8.507059e+37
    %v108 = vand.u32 %v95, 2147483648
    %v109 = vor.u32 1.1754944e-38, %v108
    %v110 = vsel %vm107, %v109, %v105
    %v111 = vmul.f32 1.0, %v110
    %v112 = vrcp.pop %v96
    %v113 = vmul.f32 %v96, %v112
    %v114 = vsub.f32 1.0, %v113
    %v115 = vmul.f32 %v112, %v114
    %v116 = vadd.f32 %v112, %v115
    %vm117 = vweird.f32 %v96
    %vm118 = vweird.f32 %v112
    %vm119 = vmor %vm117, %vm118
    %v120 = vsel %vm119, %v112, %v116
    %v121 = vand.u32 2147483647, %v96
    %vm122 = vcmp.eq.f32.partialorder %v121, 8.507059e+37
    %v123 = vand.u32 %v96, 2147483648
    %v124 = vor.u32 1.1754944e-38, %v123
    %v125 = vsel %vm122, %v124, %v120
    %v126 = vmul.f32 1.0, %v125
    %v127 = vmul.f32 %v111, 1.0614054
    %v128 = vmul.f32 %v126, 1.0614054
    %v129 = vadd.f32 %v127, -1.4531521
    %v130 = vadd.f32 %v128, -1.4531521
    %v131 = vmul.f32 %v129, %v111
    %v132 = vmul.f32 %v130, %v126
    %v133 = vadd.f32 %v131, 1.4214138
    %v134 = vadd.f32 %v132, 1.4214138
    %v135 = vmul.f32 %v133, %v111
    %v136 = vmul.f32 %v134, %v126
    %v137 = vadd.f32 %v135, -0.28449672
    %v138 = vadd.f32 %v136, -0.28449672
    %v139 = vmul.f32 %v137, %v111
    %v140 = vmul.f32 %v138, %v126
    %v141 = vadd.f32 %v139, 0.2548296
    %v142 = vadd.f32 %v140, 0.2548296
    %v143 = vmul.f32 %v141, %v111
    %v144 = vmul.f32 %v142, %v126
    %v145 = vsub.f32 0.0, %v91
    %v146 = vsub.f32 0.0, %v92
    %v147 = vmul.f32 %v145, %v91
    %v148 = vmul.f32 %v146, %v92
    %v149 = vmul.f32 %v147, 1.442695
    %v150 = vpow.pop %v149
    %v151 = vmul.f32 %v148, 1.442695
    %v152 = vpow.pop %v151
    %v153 = vmul.f32 %v143, %v150
    %v154 = vmul.f32 %v144, %v152
    %v155 = vsub.f32 1.0, %v153
    %v156 = vsub.f32 1.0, %v154
    %vm157 = vcmp.lt.f32.partialorder %v89, 0.0
    %vm158 = vcmp.lt.f32.partialorder %v90, 0.0
    %v159 = vsub.f32 0.0, %v155
    %v160 = vsub.f32 0.0, %v156
    %v161 = vsel %vm157, %v159, %v155
    %v162 = vsel %vm158, %v160, %v156
    %v163 = vadd.f32 %v161, 1.0
    %v164 = vadd.f32 %v162, 1.0
    %v165 = vmul.f32 %v87, %v163
    %v166 = vmul.f32 %v88, %v164
    %167 = vst [vmem:[#allocation7] sm:$0xff] %v165
    %168 = vst [vmem:[#allocation7 + $0x8] sm:$0xff] %v166
    // Predicated region
    $region22: #{tpu_custom_call.1} parent=1 // pred_check
      _
    $region23: #{tpu_custom_call.1} parent=1 // pred_check_branch
      %170 = sbr.rel (0) target = $region25
    $region24: #{tpu_custom_call.1} parent=1 // pred_region
      %172 = vsyncadd [#allocation4], 0
      %s173 = sshll.u32 [#allocation7], 4
      %s174 = int_to_ptr.vmem [resolvable:$true] %s173
      %s175 = sshll.u32 %s3, 4
      %s176 = int_to_ptr.hbm [resolvable:$true] %s175
      %181 = dma.vmem_to_hbm [thread:$0]  %s174, 256, %s176, [#allocation4], 128, 128, 8
    $region25: #{tpu_custom_call.1} parent=1 // pred_fallthru
      _
    // Predicated region
    $region26: #{tpu_custom_call.1} parent=1 // pred_check
      _
    $region27: #{tpu_custom_call.1} parent=1 // pred_check_branch
      %183 = sbr.rel (0) target = $region29
    $region28: #{tpu_custom_call.1} parent=1 // pred_region
      %185 = dma.done [#allocation4], 256
    $region29: #{tpu_custom_call.1} parent=1 // pred_fallthru
      _
    %186 = vsyncpa [#allocation3], 1
    %187 = vsyncpa [#allocation6], 1
    %188 = vsyncpa [#allocation4], 1

</llo_original>
